<compile_context>
chip_gen: v7x
topology: tpu7x:2x2x1
jax: 0.10.0
libtpu: 0.0.40
codegen_flags: <defaults>
</compile_context>

<pallas_src>
import jax
import jax.numpy as jnp
from jax.experimental import pallas as pl
from jax.experimental.pallas import tpu as pltpu


# --------------------------------------------------------------------------- #
# Kernel
# --------------------------------------------------------------------------- #
def headnet_kernel(x_ref, w_ref, b_ref, o_ref):
    # logits = x @ W + b : bf16 MXU operands, f32 accumulation, f32 bias add.
    x_bf = x_ref[...].astype(jnp.bfloat16)
    logits = jnp.dot(x_bf, w_ref[...], preferred_element_type=jnp.float32)
    logits = logits + b_ref[...]                      # (TB,OUT_pad)+(1,OUT_pad)

    # Numerically-stable softmax along the last (lane) axis; padded columns
    # carry a -1e30 bias so their exp underflows to exactly 0.
    m = jnp.max(logits, axis=-1, keepdims=True)
    e = jnp.exp(logits - m)
    s = jnp.sum(e, axis=-1, keepdims=True)
    inv = 1.0 / s                                      # exact per-row reciprocal
    o_ref[...] = (e * inv).astype(o_ref.dtype)


# --------------------------------------------------------------------------- #
# Host-side helpers
# --------------------------------------------------------------------------- #
def _round_up(a, m):
    return ((a + m - 1) // m) * m


def _vmem_capacity_bytes():
    """Physical per-core VMEM; conservative 64 MiB fallback (v7x per-TC)."""
    try:
        cap = int(getattr(pltpu.get_tpu_info(), "vmem_capacity_bytes", 0))
        if cap > 0:
            return cap
    except Exception:
        pass
    return 64 * 1024 * 1024


def _choose_tb(B, block_b, align=16):
    """Batch tile: multiple of 16 (bf16 sublanes); prefer >=2 grid steps and a
    tile that divides B (so no zero-padded copy of x is needed)."""
    if B <= align:
        return _round_up(B, align)                     # single (padded) tile
    cap = min(block_b, _round_up(pl.cdiv(B, 2), align))
    cap -= cap % align
    cap = max(cap, align)
    for tb in range(cap, 0, -align):
        if B % tb == 0:
            return tb                                  # divides B: no pad copy
    return cap                                         # fallback: pad the tail


def prepare_headnet_params(w, b):
    """ONE-TIME init: pad OUT to a lane-dense multiple of 128; cast W to bf16.

    Returns (w_p, b_p, out_features) to be cached and reused across calls so
    the padding pass over W never appears in the per-call HBM traffic.
    """
    IN, OUT = w.shape
    OUT_pad = max(128, _round_up(OUT, 128))
    w_p = jnp.zeros((IN, OUT_pad), jnp.bfloat16).at[:, :OUT].set(
        w.astype(jnp.bfloat16))
    b_p = jnp.full((1, OUT_pad), -1e30, jnp.float32).at[0, :OUT].set(
        b.astype(jnp.float32))
    return w_p, b_p, OUT


def headnet_forward(x, w_p, b_p, out_features, *, block_b=None):
    """x: (B, IN) f32; (w_p, b_p, out_features) from prepare_headnet_params."""
    B, IN = x.shape
    OUT_pad = w_p.shape[1]

    vmem_cap = _vmem_capacity_bytes()
    if block_b is None:
        # Bigger tiles on 128-MiB-VMEM generations (v5e/v6e); 256 for v7x.
        block_b = 512 if vmem_cap >= 96 * 1024 * 1024 else 256

    TB = _choose_tb(B, block_b)
    B_pad = _round_up(B, TB)
    if B_pad != B:
        x = jnp.zeros((B_pad, IN), x.dtype).at[:B, :].set(x)
    grid = (B_pad // TB,)

    # VMEM budget: single-buffered bf16 W + f32 bias, double-buffered f32 x and
    # f32 out tiles; 2x headroom for in-kernel f32 temporaries (logits/exp).
    need = (2 * IN * OUT_pad            # W, bf16, Buffered(1)
            + 4 * OUT_pad               # bias, f32, Buffered(1)
            + 2 * 4 * TB * IN           # x tiles, f32, double-buffered
            + 2 * 4 * TB * OUT_pad)     # out tiles, f32, double-buffered
    vmem_limit = int(min(max(2 * need, 16 * 1024 * 1024),
                         (vmem_cap * 7) // 8))

    cost = pl.CostEstimate(
        flops=2 * B_pad * IN * OUT_pad,
        transcendentals=B_pad * OUT_pad,
        bytes_accessed=(4 * B_pad * IN + 2 * IN * OUT_pad + 4 * OUT_pad
                        + 4 * B_pad * OUT_pad),
    )

    out_pad = pl.pallas_call(
        headnet_kernel,
        out_shape=jax.ShapeDtypeStruct((B_pad, OUT_pad), jnp.float32),
        grid_spec=pltpu.PrefetchScalarGridSpec(
            num_scalar_prefetch=0,
            grid=grid,
            in_specs=[
                # streamed x tile (auto double-buffered)
                pl.BlockSpec((TB, IN), lambda i: (i, 0)),
                # resident bf16 weight / f32 bias: constant index_map, single
                # buffer (no point double-buffering a never-changing block)
                pl.BlockSpec((IN, OUT_pad), lambda i: (0, 0),
                             pipeline_mode=pl.Buffered(1)),
                pl.BlockSpec((1, OUT_pad), lambda i: (0, 0),
                             pipeline_mode=pl.Buffered(1)),
            ],
            out_specs=pl.BlockSpec((TB, OUT_pad), lambda i: (i, 0)),
        ),
        compiler_params=pltpu.CompilerParams(
            dimension_semantics=("parallel",),
            vmem_limit_bytes=vmem_limit,
        ),
        cost_estimate=cost,
    )(x, w_p, b_p)

    return out_pad[:B, :out_features]


# --------------------------------------------------------------------------- #
# Demo / self-check
# --------------------------------------------------------------------------- #
if __name__ == "__main__":
    key = jax.random.PRNGKey(0)
    B, IN, OUT = 8, 32, 16

    kx, kw, kb = jax.random.split(key, 3)
    x = jax.random.normal(kx, (B, IN), dtype=jnp.float32)

    # deterministic nn.Linear-style init: U(-1/sqrt(IN), 1/sqrt(IN))
    bound = 1.0 / jnp.sqrt(jnp.float32(IN))
    w = jax.random.uniform(kw, (IN, OUT), minval=-bound, maxval=bound,
                           dtype=jnp.float32)
    b = jax.random.uniform(kb, (OUT,), minval=-bound, maxval=bound,
                           dtype=jnp.float32)

    # one-time cached param prep (padded, bf16 weight)
    w_p, b_p, out_features = prepare_headnet_params(w, b)

    out = headnet_forward(x, w_p, b_p, out_features)
    jax.block_until_ready(out)
    assert out.shape == (B, OUT)

    # Reference with matched bf16 matmul precision (tight tolerance) ...
    ref_bf16 = jax.nn.softmax(
        jnp.dot(x.astype(jnp.bfloat16), w.astype(jnp.bfloat16),
                preferred_element_type=jnp.float32) + b, axis=-1)
    assert jnp.allclose(out, ref_bf16, atol=1e-3, rtol=1e-3)

    # ... and the pure-f32 PyTorch-equivalent reference (bf16-operand slack).
    ref_f32 = jax.nn.softmax(x @ w + b, axis=-1)
    assert jnp.allclose(out, ref_f32, atol=5e-3, rtol=5e-3)

    # Exact normalization: rows sum to 1 within f32 rounding.
    assert jnp.allclose(jnp.sum(out, axis=-1), 1.0, atol=1e-3)

    print("KERNEL_OK")
</pallas_src>

<mosaic_0001>
module attributes {stable_mosaic.version = 11 : i64} {
  func.func @headnet_kernel(%arg0: i32, %arg1: memref<16x32xf32, #tpu.memory_space<vmem>>, %arg2: memref<32x128xbf16, #tpu.memory_space<vmem>>, %arg3: memref<1x128xf32, #tpu.memory_space<vmem>>, %arg4: memref<16x128xf32, #tpu.memory_space<vmem>>) attributes {dimension_semantics = [#tpu.dimension_semantics<parallel>], iteration_bounds = array<i64: 1>, scalar_prefetch = 0 : i64, scratch_operands = 0 : i64, tpu.core_type = #tpu.core_type<tc>, window_params = [{transform_indices = @transform_0, window_bounds = array<i64: 16, 32>}, {pipeline_mode = #tpu.pipeline_mode<synchronous>, transform_indices = @transform_1, window_bounds = array<i64: 32, 128>}, {pipeline_mode = #tpu.pipeline_mode<synchronous>, transform_indices = @transform_2, window_bounds = array<i64: 1, 128>}, {transform_indices = @transform_3, window_bounds = array<i64: 16, 128>}]} {
    %c0 = arith.constant 0 : index
    %c0_0 = arith.constant 0 : index
    %0 = vector.load %arg1[%c0, %c0_0] : memref<16x32xf32, #tpu.memory_space<vmem>>, vector<16x32xf32>
    %1 = arith.truncf %0 : vector<16x32xf32> to vector<16x32xbf16>
    %c0_1 = arith.constant 0 : index
    %c0_2 = arith.constant 0 : index
    %2 = vector.load %arg2[%c0_1, %c0_2] : memref<32x128xbf16, #tpu.memory_space<vmem>>, vector<32x128xbf16>
    %cst = arith.constant dense<0.000000e+00> : vector<16x128xf32>
    %3 = tpu.matmul %1, %2, %cst {dimension_numbers = #tpu.dot_dimension_numbers<[1], [0], [0], [1], [0, 0, 1, 1], [], []>} : vector<16x32xbf16>, vector<32x128xbf16>, vector<16x128xf32> -> vector<16x128xf32>
    %c0_3 = arith.constant 0 : index
    %c0_4 = arith.constant 0 : index
    %4 = vector.load %arg3[%c0_3, %c0_4] : memref<1x128xf32, #tpu.memory_space<vmem>>, vector<1x128xf32>
    %5 = vector.broadcast %4 : vector<1x128xf32> to vector<16x128xf32>
    %6 = arith.addf %3, %5 : vector<16x128xf32>
    %cst_5 = arith.constant dense<0xFF800000> : vector<16xf32>
    %7 = vector.multi_reduction <maximumf>, %6, %cst_5 [1] : vector<16x128xf32> to vector<16xf32>
    %8 = vector.shape_cast %7 : vector<16xf32> to vector<16x1xf32>
    %9 = vector.broadcast %8 : vector<16x1xf32> to vector<16x128xf32>
    %10 = arith.subf %6, %9 : vector<16x128xf32>
    %11 = math.exp %10 : vector<16x128xf32>
    %cst_6 = arith.constant dense<0.000000e+00> : vector<16xf32>
    %12 = vector.multi_reduction <add>, %11, %cst_6 [1] : vector<16x128xf32> to vector<16xf32>
    %13 = vector.shape_cast %12 : vector<16xf32> to vector<16x1xf32>
    %cst_7 = arith.constant 1.000000e+00 : f32
    %14 = vector.broadcast %cst_7 : f32 to vector<16x1xf32>
    %15 = arith.divf %14, %13 : vector<16x1xf32>
    %16 = vector.broadcast %15 : vector<16x1xf32> to vector<16x128xf32>
    %17 = arith.mulf %11, %16 : vector<16x128xf32>
    %c0_8 = arith.constant 0 : index
    %c0_9 = arith.constant 0 : index
    %18 = vector.load %arg4[%c0_8, %c0_9] : memref<16x128xf32, #tpu.memory_space<vmem>>, vector<16x128xf32>
    tpu.vector_store %arg4[%c0_8, %c0_9], %17 {strides = array<i32>} : memref<16x128xf32, #tpu.memory_space<vmem>>, vector<16x128xf32>,
    return
  }
  func.func @transform_0(%arg0: i32) -> (i32, i32) {
    %c0_i32 = arith.constant 0 : i32
    %c0_i32_0 = arith.constant 0 : i32
    return %arg0, %c0_i32 : i32, i32
  }
  func.func @transform_1(%arg0: i32) -> (i32, i32) {
    %c0_i32 = arith.constant 0 : i32
    %c0_i32_0 = arith.constant 0 : i32
    %c0_i32_1 = arith.constant 0 : i32
    return %c0_i32, %c0_i32_0 : i32, i32
  }
  func.func @transform_2(%arg0: i32) -> (i32, i32) {
    %c0_i32 = arith.constant 0 : i32
    %c0_i32_0 = arith.constant 0 : i32
    %c0_i32_1 = arith.constant 0 : i32
    return %c0_i32, %c0_i32_0 : i32, i32
  }
  func.func @transform_3(%arg0: i32) -> (i32, i32) {
    %c0_i32 = arith.constant 0 : i32
    %c0_i32_0 = arith.constant 0 : i32
    return %arg0, %c0_i32 : i32, i32
  }
}

</mosaic_0001>

<llo_original>
// kernel: tpu_custom_call.1
$region0: #{tpu_custom_call.1}
  #allocation0 [shape = 'u32[]', space=smem, size = 0x4, offset = 0x4, fixed_abs, tag = 'smem constant byte address 0x4 - core index']
  #allocation1 [shape = 'u32[144,128]{1,0:T(1,128)}', space=vmem, size = 0x12000, scoped, tag = 'internal scratch']
  %s0 = inlined_call_operand.hbm [shape: f32[16,32], index: 0, kind: input, shape index: {}]
  %s1 = inlined_call_operand.hbm [shape: bf16[32,128], index: 1, kind: input, shape index: {}]
  %s2 = inlined_call_operand.vmem [shape: f32[1,128], index: 2, kind: input, shape index: {}]
  %s3 = inlined_call_operand.hbm [shape: f32[16,128], index: 3, kind: output, shape index: {}]
  %s4 = sld [smem:[#allocation0]]
  $region30: #{tpu_custom_call.1} parent=0
    _
  %s6 = ssub.s32 1, %s4
  %s7 = scalar_select 0, %s6, %s4
  $region1: #{tpu_custom_call.1} parent=0
    #allocation2 [shape = 'u8[8192]{0}', space=vmem, size = 0x2000, scoped, tag = 'input window, operand 0, single buffered']
    #allocation3 [shape = 's32[1]{0}', space=sflag, size = 0x4, scoped, tag = 'scoped memory for tpu_custom_call.1']
    #allocation4 [shape = 's32[1]{0}', space=sflag, size = 0x4, scoped, tag = 'scoped memory for tpu_custom_call.1']
    #allocation5 [shape = 'u8[8192]{0}', space=vmem, size = 0x2000, scoped, tag = 'input window, operand 1, single buffered']
    #allocation6 [shape = 's32[1]{0}', space=sflag, size = 0x4, scoped, tag = 'scoped memory for tpu_custom_call.1']
    #allocation7 [shape = 'u8[8192]{0}', space=vmem, size = 0x2000, scoped, tag = 'output window, operand 0, single buffered']
    %8 = vsyncpa [#allocation3], 0
    %9 = vsyncpa [#allocation6], 0
    %10 = vsyncpa [#allocation4], 0
    // Predicated region
    $region2: #{tpu_custom_call.1} parent=1 // pred_check
      _
    $region3: #{tpu_custom_call.1} parent=1 // pred_check_branch
      %12 = sbr.rel (0) target = $region5
    $region4: #{tpu_custom_call.1} parent=1 // pred_region
      %s14 = ssub.s32 256, 256
      %15 = vsyncadd [#allocation3], %s14
      %s16 = sshll.u32 [#allocation2], 4
      %s17 = int_to_ptr.vmem [resolvable:$true] %s16
      %22 = dma.hbm_to_vmem [thread:$0]  %s0, 256, %s17, [#allocation3], 128, 128, 8
    $region5: #{tpu_custom_call.1} parent=1 // pred_fallthru
      _
    // Predicated region
    $region6: #{tpu_custom_call.1} parent=1 // pred_check
      _
    $region7: #{tpu_custom_call.1} parent=1 // pred_check_branch
      %24 = sbr.rel (0) target = $region9
    $region8: #{tpu_custom_call.1} parent=1 // pred_region
      %s26 = ssub.s32 256, 256
      %27 = vsyncadd [#allocation6], %s26
      %s28 = sshll.u32 [#allocation5], 4
      %s29 = int_to_ptr.vmem [resolvable:$true] %s28
      %34 = dma.hbm_to_vmem [thread:$0]  %s1, 256, %s29, [#allocation6], 64, 64, 4
    $region9: #{tpu_custom_call.1} parent=1 // pred_fallthru
      _
    // Predicated region
    $region10: #{tpu_custom_call.1} parent=1 // pred_check
      _
    $region11: #{tpu_custom_call.1} parent=1 // pred_check_branch
      %36 = sbr.rel (0) target = $region13
    $region12: #{tpu_custom_call.1} parent=1 // pred_region
      _
    $region13: #{tpu_custom_call.1} parent=1 // pred_fallthru
      _
    // Predicated region
    $region14: #{tpu_custom_call.1} parent=1 // pred_check
      _
    $region15: #{tpu_custom_call.1} parent=1 // pred_check_branch
      %38 = sbr.rel (0) target = $region17
    $region16: #{tpu_custom_call.1} parent=1 // pred_region
      %39 = dma.done [#allocation3], 256
    $region17: #{tpu_custom_call.1} parent=1 // pred_fallthru
      _
    // Predicated region
    $region18: #{tpu_custom_call.1} parent=1 // pred_check
      _
    $region19: #{tpu_custom_call.1} parent=1 // pred_check_branch
      %41 = sbr.rel (0) target = $region21
    $region20: #{tpu_custom_call.1} parent=1 // pred_region
      %42 = dma.done [#allocation6], 256
    $region21: #{tpu_custom_call.1} parent=1 // pred_fallthru
      _
    %v44 = vld [vmem:[#allocation2] sm:$0xff]
    %v45 = vld [vmem:[#allocation2 + $0x8] sm:$0xff]
    %v46 = vpack.c.bf16 %v45, %v44
    %v47 = vld [vmem:[#allocation5] sm:$0xf]
    %v48 = vld [vmem:[#allocation5 + $0x4] sm:$0xf]
    %v49 = vld [vmem:[#allocation5 + $0x8] sm:$0xf]
    %v50 = vld [vmem:[#allocation5 + $0xc] sm:$0xf]
    %v51 = vld [vmem:[%s2] sm:$0x1]
    %v53 = vlaneseq
    %v54 = vshrl.u32 %v53, 7
    %v55 = vsub.s32 0, %v54
    %v56 = vrot.slane %v51, %v55
    %v62 = vunpack.c.l.b16 %v47
    %v63 = vunpack.c.l.b16 %v48
    %v64 = vunpack.c.l.b16 %v49
    %v65 = vunpack.c.l.b16 %v50
    %v66 = vpack.c.b16 %v63, %v62
    %v67 = vpack.c.b16 %v65, %v64
    %vm70 = vcmask 261120
    %v72 = vsel %vm70, %v46, 0
    %74 = vmatprep.subr.bf16.mxu0 0
    %75 = vmatpush1.bf16.msra.mxu0 %v66
    %76 = vmatprep.subr.bf16.mxu0 0
    %77 = vmatpush1.bf16.msra.mxu0 %v67
    %78 = vmatprep.subr.bf16.mxu0 0
    %79 = vmatpush1.bf16.msra.mxu0 0
    %80 = vmatprep.subr.bf16.mxu0 0
    %81 = vmatpush1.bf16.msra.mxu0 0
    %82 = vmatprep.subr.bf16.mxu0 0
    %83 = vmatpush1.bf16.msra.mxu0 0
    %84 = vmatprep.subr.bf16.mxu0 0
    %85 = vmatpush1.bf16.msra.mxu0 0
    %86 = vmatprep.subr.bf16.mxu0 0
    %87 = vmatpush1.bf16.msra.mxu0 0
    %88 = vmatprep.subr.bf16.mxu0 0
    %89 = vmatpush1.bf16.msra.mxu0 0
    %90 = vmatprep.subr.bf16.mxu0 0
    %91 = vmatpush1.bf16.msra.mxu0 0
    %92 = vmatprep.subr.bf16.mxu0 0
    %93 = vmatpush1.bf16.msra.mxu0 0
    %94 = vmatprep.subr.bf16.mxu0 0
    %95 = vmatpush1.bf16.msra.mxu0 0
    %96 = vmatprep.subr.bf16.mxu0 0
    %97 = vmatpush1.bf16.msra.mxu0 0
    %98 = vmatprep.subr.bf16.mxu0 0
    %99 = vmatpush1.bf16.msra.mxu0 0
    %100 = vmatprep.subr.bf16.mxu0 0
    %101 = vmatpush1.bf16.msra.mxu0 0
    %102 = vmatprep.subr.bf16.mxu0 0
    %103 = vmatpush1.bf16.msra.mxu0 0
    %104 = vmatprep.subr.bf16.mxu0 0
    %105 = vmatpush1.bf16.msra.mxu0 0
    %106 = vmatprep.mubr.bf16.mxu0 0
    %107 = vmatmul.mubr.bf16.gmra.mrb[0].mxu0 %v72
    %v108 = vpop.f32.mrb[0].mxu0
    %v109 = vadd.f32 %v56, %v108
    %v110 = vpop.f32.mrb[0].mxu0
    %v111 = vpop.f32.mrb[0].mxu0
    %v112 = vadd.f32 %v56, %v111
    %v113 = vpop.f32.mrb[0].mxu0
    %114 = vdwg.mxu0
    %115 = vmax.xlane.f32.xlu0 %v109
    %v116 = vpop.xlane.xlu0 %115
    %117 = vmax.xlane.f32.xlu0 %v112
    %v118 = vpop.xlane.xlu0 %117
    %v119 = vsub.f32 %v109, %v116
    %v120 = vsub.f32 %v112, %v118
    %v121 = vmul.f32 %v119, 1.442695
    %v122 = vpow.pop %v121
    %v123 = vmul.f32 %v120, 1.442695
    %v124 = vpow.pop %v123
    %125 = vadd.xlane.f32.xlu0 %v122
    %v126 = vpop.xlane.xlu0 %125
    %127 = vadd.xlane.f32.xlu0 %v124
    %v128 = vpop.xlane.xlu0 %127
    %v129 = vrcp.pop %v126
    %v130 = vmul.f32 1.0, %v129
    %v131 = vrcp.pop %v128
    %v132 = vmul.f32 1.0, %v131
    %v133 = vmul.f32 %v122, %v130
    %v134 = vmul.f32 %v124, %v132
    %135 = vst [vmem:[#allocation7] sm:$0xff] %v133
    %136 = vst [vmem:[#allocation7 + $0x8] sm:$0xff] %v134
    // Predicated region
    $region22: #{tpu_custom_call.1} parent=1 // pred_check
      _
    $region23: #{tpu_custom_call.1} parent=1 // pred_check_branch
      %138 = sbr.rel (0) target = $region25
    $region24: #{tpu_custom_call.1} parent=1 // pred_region
      %s140 = ssub.s32 256, 256
      %141 = vsyncadd [#allocation4], %s140
      %s142 = sshll.u32 [#allocation7], 4
      %s143 = int_to_ptr.vmem [resolvable:$true] %s142
      %148 = dma.vmem_to_hbm [thread:$0]  %s143, 256, %s3, [#allocation4], 128, 128, 8
    $region25: #{tpu_custom_call.1} parent=1 // pred_fallthru
      _
    // Predicated region
    $region26: #{tpu_custom_call.1} parent=1 // pred_check
      _
    $region27: #{tpu_custom_call.1} parent=1 // pred_check_branch
      %150 = sbr.rel (0) target = $region29
    $region28: #{tpu_custom_call.1} parent=1 // pred_region
      %151 = dma.done [#allocation4], 256
    $region29: #{tpu_custom_call.1} parent=1 // pred_fallthru
      _
    %152 = vsyncpa [#allocation3], 1
    %153 = vsyncpa [#allocation6], 1
    %154 = vsyncpa [#allocation4], 1

</llo_original>
